<compile_context>
chip_gen: v7x
topology: tpu7x:2x2x1
jax: 0.10.0
libtpu: 0.0.40
codegen_flags: <defaults>
</compile_context>

<pallas_src>
from functools import partial

import jax
import jax.numpy as jnp
from jax.experimental import pallas as pl
from jax.experimental.pallas import tpu as pltpu


def _shift_flat(x, o):
    """y[:, p] = x[:, p + o] if 0 <= p + o < HW else 0  (static shift o)."""
    C, HW = x.shape
    if o == 0:
        return x
    if o > 0:
        return jnp.concatenate(
            [x[:, o:], jnp.zeros((C, o), x.dtype)], axis=1)
    return jnp.concatenate(
        [jnp.zeros((C, -o), x.dtype), x[:, :HW + o]], axis=1)


def _im2col_3x3(x, W, mask_l, mask_r):
    """Build the (9*C, HW) patch for a 3x3 'same' conv from a (C, HW) slab.

    Row order is tap-major (dh, dw), channel-minor, matching the weight
    reshape in the wrapper.  The flat shift by dh*W + dw plus the column
    masks (dw = -1 / +1) implements the zero padding exactly.
    """
    slabs = []
    for dh in (-1, 0, 1):
        for dw in (-1, 0, 1):
            s = _shift_flat(x, dh * W + dw)
            if dw == -1:
                s = jnp.where(mask_l, s, 0.0)
            elif dw == 1:
                s = jnp.where(mask_r, s, 0.0)
            slabs.append(s)
    return jnp.concatenate(slabs, axis=0)


def resblock_kernel(H, W, cin, c1,
                    x_ref, w1_ref, b1_ref, w2_ref, b2_ref, out_ref):
    # Block shapes:
    #   x_ref   : (1, Cp,  H*W)   zero-padded input channels, spatial on lanes
    #   w1_ref  : (C1p, 9*Cp)     BN-scale-folded conv1 weights (im2col layout)
    #   w2_ref  : (C1p, 9*C1p)    BN-scale-folded conv2 weights
    #   b*_ref  : (C1p, 1)        folded conv-bias + BN bias
    #   out_ref : (1, cin + c1, H*W)
    HW = H * W
    x = x_ref[0].astype(jnp.float32)                      # (Cp, HW)

    w_idx = jax.lax.broadcasted_iota(jnp.int32, (1, HW), 1) % W
    mask_l = w_idx >= 1                                    # valid for dw = -1
    mask_r = w_idx < (W - 1)                               # valid for dw = +1

    # conv1 (+ folded bn1) + relu : one MXU matmul, (C1p, HW) accumulator.
    patch1 = _im2col_3x3(x, W, mask_l, mask_r)             # (9*Cp, HW)
    y = jnp.dot(w1_ref[...], patch1, preferred_element_type=jnp.float32)
    y = jnp.maximum(y + b1_ref[...], 0.0)                  # (C1p, HW)

    # conv2 (+ folded bn2) + relu : one MXU matmul.
    patch2 = _im2col_3x3(y, W, mask_l, mask_r)             # (9*C1p, HW)
    z = jnp.dot(w2_ref[...], patch2, preferred_element_type=jnp.float32)
    z = jnp.maximum(z + b2_ref[...], 0.0)                  # (C1p, HW)

    # relu(cat(identity, x)) == cat(relu(identity), relu(x)); both halves are
    # written lane-dense (256 lanes) into the single concatenated output.
    out_ref[0, :cin, :] = jnp.maximum(x[:cin, :], 0.0).astype(out_ref.dtype)
    out_ref[0, cin:cin + c1, :] = z[:c1, :].astype(out_ref.dtype)


def _ceil_to(x, m):
    return (x + m - 1) // m * m


def resblock_forward(x_nchw, params, eps=1e-5):
    """ResBlock(in_dim, out_dim, pool=None).forward, eval-mode BatchNorm."""
    # TODO(synk): the `pool is not None` branch (MaxPool2d + stride-2 conv1)
    # is not implemented; this covers the default pool=None configuration.
    (w1, b1, g1, be1, m1, v1, w2, b2, g2, be2, m2, v2) = params
    N, Cin, H, W = x_nchw.shape
    C1 = w1.shape[0]
    HW = H * W
    Cp = _ceil_to(Cin, 8)     # pad channel dims to sublane multiples so all
    C1p = _ceil_to(C1, 8)     # in-kernel sublane concats are tile-aligned

    # Fold conv bias + BatchNorm (eval):
    #   bn(conv_w(x)+b) = conv_{w*s}(x) + ((b - mean)*s + beta),  s = g/sqrt(v+eps)
    s1 = g1 / jnp.sqrt(v1 + eps)
    t1 = (b1 - m1) * s1 + be1
    s2 = g2 / jnp.sqrt(v2 + eps)
    t2 = (b2 - m2) * s2 + be2

    # Weights: scale folded in, laid out (Cout, 9*Cin) tap-major/channel-minor
    # to match the in-kernel im2col patch row order.
    w1_t = jnp.transpose(w1 * s1[:, None, None, None], (0, 2, 3, 1))
    w1_t = jnp.pad(w1_t, ((0, C1p - C1), (0, 0), (0, 0), (0, Cp - Cin)))
    w1_mat = w1_t.reshape(C1p, 9 * Cp).astype(jnp.float32)

    w2_t = jnp.transpose(w2 * s2[:, None, None, None], (0, 2, 3, 1))
    w2_t = jnp.pad(w2_t, ((0, C1p - C1), (0, 0), (0, 0), (0, C1p - C1)))
    w2_mat = w2_t.reshape(C1p, 9 * C1p).astype(jnp.float32)

    t1p = jnp.pad(t1, (0, C1p - C1)).reshape(C1p, 1).astype(jnp.float32)
    t2p = jnp.pad(t2, (0, C1p - C1)).reshape(C1p, 1).astype(jnp.float32)

    # NCHW with (H, W) flattened is already (N, C, H*W): no transpose needed.
    xk = x_nchw.reshape(N, Cin, HW)
    xk = jnp.pad(xk, ((0, 0), (0, Cp - Cin), (0, 0)))

    out = pl.pallas_call(
        partial(resblock_kernel, H, W, Cin, C1),
        out_shape=jax.ShapeDtypeStruct((N, Cin + C1, HW), x_nchw.dtype),
        grid=(N,),
        in_specs=[
            pl.BlockSpec((1, Cp, HW), lambda n: (n, 0, 0)),
            pl.BlockSpec((C1p, 9 * Cp), lambda n: (0, 0)),
            pl.BlockSpec((C1p, 1), lambda n: (0, 0)),
            pl.BlockSpec((C1p, 9 * C1p), lambda n: (0, 0)),
            pl.BlockSpec((C1p, 1), lambda n: (0, 0)),
        ],
        out_specs=pl.BlockSpec((1, Cin + C1, HW), lambda n: (n, 0, 0)),
        compiler_params=pltpu.CompilerParams(
            dimension_semantics=("parallel",)),
    )(xk, w1_mat, t1p, w2_mat, t2p)

    return out.reshape(N, Cin + C1, H, W)


def resblock_ref(x, params, eps=1e-5):
    """Pure-JAX reference (NCHW, OIHW) mirroring the PyTorch forward."""
    (w1, b1, g1, be1, m1, v1, w2, b2, g2, be2, m2, v2) = params

    def conv(xx, w, b):
        y = jax.lax.conv_general_dilated(
            xx, w, window_strides=(1, 1), padding=((1, 1), (1, 1)),
            dimension_numbers=('NCHW', 'OIHW', 'NCHW'))
        return y + b[None, :, None, None]

    def bn(xx, g, be, m, v):
        return ((xx - m[None, :, None, None])
                / jnp.sqrt(v + eps)[None, :, None, None]
                * g[None, :, None, None] + be[None, :, None, None])

    y = jax.nn.relu(bn(conv(x, w1, b1), g1, be1, m1, v1))
    z = bn(conv(y, w2, b2), g2, be2, m2, v2)
    return jax.nn.relu(jnp.concatenate([x, z], axis=1))


if __name__ == "__main__":
    N, Cin, H, W = 2, 4, 16, 16     # in_dim = 4
    Cout = 8                        # out_dim = 8

    keys = jax.random.split(jax.random.PRNGKey(0), 13)
    x = jax.random.normal(keys[0], (N, Cin, H, W), jnp.float32)

    # Deterministic synthetic parameters (PyTorch-layout shapes).
    w1 = 0.1 * jax.random.normal(keys[1], (Cout, Cin, 3, 3), jnp.float32)
    b1 = 0.1 * jax.random.normal(keys[2], (Cout,), jnp.float32)
    g1 = 1.0 + 0.1 * jax.random.normal(keys[3], (Cout,), jnp.float32)
    be1 = 0.1 * jax.random.normal(keys[4], (Cout,), jnp.float32)
    m1 = 0.1 * jax.random.normal(keys[5], (Cout,), jnp.float32)
    v1 = 1.0 + 0.1 * jnp.abs(jax.random.normal(keys[6], (Cout,), jnp.float32))

    w2 = 0.1 * jax.random.normal(keys[7], (Cout, Cout, 3, 3), jnp.float32)
    b2 = 0.1 * jax.random.normal(keys[8], (Cout,), jnp.float32)
    g2 = 1.0 + 0.1 * jax.random.normal(keys[9], (Cout,), jnp.float32)
    be2 = 0.1 * jax.random.normal(keys[10], (Cout,), jnp.float32)
    m2 = 0.1 * jax.random.normal(keys[11], (Cout,), jnp.float32)
    v2 = 1.0 + 0.1 * jnp.abs(jax.random.normal(keys[12], (Cout,), jnp.float32))

    params = (w1, b1, g1, be1, m1, v1, w2, b2, g2, be2, m2, v2)

    out = jax.block_until_ready(resblock_forward(x, params))
    assert out.shape == (N, Cin + Cout, H, W), out.shape

    ref = jax.block_until_ready(resblock_ref(x, params))
    max_err = float(jnp.max(jnp.abs(out - ref)))
    assert max_err < 1e-4, f"max abs err {max_err}"

    print("KERNEL_OK")
</pallas_src>

<mosaic_0001>
module attributes {stable_mosaic.version = 11 : i64} {
  func.func @resblock_kernel(%arg0: i32, %arg1: memref<1x8x256xf32, #tpu.memory_space<vmem>>, %arg2: memref<8x72xf32, #tpu.memory_space<vmem>>, %arg3: memref<8x1xf32, #tpu.memory_space<vmem>>, %arg4: memref<8x72xf32, #tpu.memory_space<vmem>>, %arg5: memref<8x1xf32, #tpu.memory_space<vmem>>, %arg6: memref<1x12x256xf32, #tpu.memory_space<vmem>>) attributes {dimension_semantics = [#tpu.dimension_semantics<parallel>], iteration_bounds = array<i64: 2>, scalar_prefetch = 0 : i64, scratch_operands = 0 : i64, tpu.core_type = #tpu.core_type<tc>, window_params = [{transform_indices = @transform_0, window_bounds = array<i64: 1, 8, 256>}, {pipeline_mode = #tpu.pipeline_mode<synchronous>, transform_indices = @transform_1, window_bounds = array<i64: 8, 72>}, {pipeline_mode = #tpu.pipeline_mode<synchronous>, transform_indices = @transform_2, window_bounds = array<i64: 8, 1>}, {pipeline_mode = #tpu.pipeline_mode<synchronous>, transform_indices = @transform_3, window_bounds = array<i64: 8, 72>}, {pipeline_mode = #tpu.pipeline_mode<synchronous>, transform_indices = @transform_4, window_bounds = array<i64: 8, 1>}, {transform_indices = @transform_5, window_bounds = array<i64: 1, 12, 256>}]} {
    %c0 = arith.constant 0 : index
    %c0_0 = arith.constant 0 : index
    %c0_1 = arith.constant 0 : index
    %0 = vector.load %arg1[%c0, %c0_0, %c0_1] : memref<1x8x256xf32, #tpu.memory_space<vmem>>, vector<1x8x256xf32>
    %1 = vector.shape_cast %0 : vector<1x8x256xf32> to vector<8x256xf32>
    %2 = tpu.iota {dimensions = array<i32: 1>} : vector<1x256xi32>
    %c16_i32 = arith.constant 16 : i32
    %c0_i32 = arith.constant 0 : i32
    %3 = arith.cmpi eq, %c16_i32, %c0_i32 : i32
    %c1_i32 = arith.constant 1 : i32
    %4 = arith.select %3, %c1_i32, %c16_i32 : i32
    %5 = vector.broadcast %4 : i32 to vector<1x256xi32>
    %6 = arith.remsi %2, %5 : vector<1x256xi32>
    %c0_i32_2 = arith.constant 0 : i32
    %7 = vector.broadcast %c0_i32_2 : i32 to vector<1x256xi32>
    %8 = arith.cmpi ne, %6, %7 : vector<1x256xi32>
    %c0_i32_3 = arith.constant 0 : i32
    %9 = vector.broadcast %c0_i32_3 : i32 to vector<1x256xi32>
    %10 = arith.cmpi slt, %6, %9 : vector<1x256xi32>
    %c0_i32_4 = arith.constant 0 : i32
    %11 = arith.cmpi slt, %4, %c0_i32_4 : i32
    %12 = vector.broadcast %11 : i1 to vector<1x256xi1>
    %13 = vector.broadcast %12 : vector<1x256xi1> to vector<1x256xi1>
    %14 = arith.xori %10, %13 : vector<1x256xi1>
    %15 = arith.andi %14, %8 : vector<1x256xi1>
    %16 = vector.broadcast %4 : i32 to vector<1x256xi32>
    %17 = arith.addi %6, %16 : vector<1x256xi32>
    %18 = arith.select %15, %17, %6 : vector<1x256xi1>, vector<1x256xi32>
    %c1_i32_5 = arith.constant 1 : i32
    %19 = vector.broadcast %c1_i32_5 : i32 to vector<1x256xi32>
    %20 = arith.cmpi sge, %18, %19 : vector<1x256xi32>
    %c15_i32 = arith.constant 15 : i32
    %21 = vector.broadcast %c15_i32 : i32 to vector<1x256xi32>
    %22 = arith.cmpi slt, %18, %21 : vector<1x256xi32>
    %cst = arith.constant 0.000000e+00 : f32
    %23 = vector.broadcast %cst : f32 to vector<8x17xf32>
    %24 = vector.extract_strided_slice %1 {offsets = [0, 0], sizes = [8, 239], strides = [1, 1]} : vector<8x256xf32> to vector<8x239xf32>
    %25 = tpu.concatenate %23, %24 in 1 : vector<8x17xf32>, vector<8x239xf32> -> vector<8x256xf32>
    %cst_6 = arith.constant 0.000000e+00 : f32
    %26 = vector.shape_cast %20 : vector<1x256xi1> to vector<1x256xi1>
    %27 = vector.broadcast %26 : vector<1x256xi1> to vector<8x256xi1>
    %28 = vector.broadcast %cst_6 : f32 to vector<8x256xf32>
    %29 = arith.select %27, %25, %28 : vector<8x256xi1>, vector<8x256xf32>
    %cst_7 = arith.constant 0.000000e+00 : f32
    %30 = vector.broadcast %cst_7 : f32 to vector<8x16xf32>
    %31 = vector.extract_strided_slice %1 {offsets = [0, 0], sizes = [8, 240], strides = [1, 1]} : vector<8x256xf32> to vector<8x240xf32>
    %32 = tpu.concatenate %30, %31 in 1 : vector<8x16xf32>, vector<8x240xf32> -> vector<8x256xf32>
    %cst_8 = arith.constant 0.000000e+00 : f32
    %33 = vector.broadcast %cst_8 : f32 to vector<8x15xf32>
    %34 = vector.extract_strided_slice %1 {offsets = [0, 0], sizes = [8, 241], strides = [1, 1]} : vector<8x256xf32> to vector<8x241xf32>
    %35 = tpu.concatenate %33, %34 in 1 : vector<8x15xf32>, vector<8x241xf32> -> vector<8x256xf32>
    %cst_9 = arith.constant 0.000000e+00 : f32
    %36 = vector.shape_cast %22 : vector<1x256xi1> to vector<1x256xi1>
    %37 = vector.broadcast %36 : vector<1x256xi1> to vector<8x256xi1>
    %38 = vector.broadcast %cst_9 : f32 to vector<8x256xf32>
    %39 = arith.select %37, %35, %38 : vector<8x256xi1>, vector<8x256xf32>
    %cst_10 = arith.constant 0.000000e+00 : f32
    %40 = vector.broadcast %cst_10 : f32 to vector<8x1xf32>
    %41 = vector.extract_strided_slice %1 {offsets = [0, 0], sizes = [8, 255], strides = [1, 1]} : vector<8x256xf32> to vector<8x255xf32>
    %42 = tpu.concatenate %40, %41 in 1 : vector<8x1xf32>, vector<8x255xf32> -> vector<8x256xf32>
    %cst_11 = arith.constant 0.000000e+00 : f32
    %43 = vector.shape_cast %20 : vector<1x256xi1> to vector<1x256xi1>
    %44 = vector.broadcast %43 : vector<1x256xi1> to vector<8x256xi1>
    %45 = vector.broadcast %cst_11 : f32 to vector<8x256xf32>
    %46 = arith.select %44, %42, %45 : vector<8x256xi1>, vector<8x256xf32>
    %47 = vector.extract_strided_slice %1 {offsets = [0, 1], sizes = [8, 255], strides = [1, 1]} : vector<8x256xf32> to vector<8x255xf32>
    %cst_12 = arith.constant 0.000000e+00 : f32
    %48 = vector.broadcast %cst_12 : f32 to vector<8x1xf32>
    %49 = tpu.concatenate %47, %48 in 1 : vector<8x255xf32>, vector<8x1xf32> -> vector<8x256xf32>
    %cst_13 = arith.constant 0.000000e+00 : f32
    %50 = vector.shape_cast %22 : vector<1x256xi1> to vector<1x256xi1>
    %51 = vector.broadcast %50 : vector<1x256xi1> to vector<8x256xi1>
    %52 = vector.broadcast %cst_13 : f32 to vector<8x256xf32>
    %53 = arith.select %51, %49, %52 : vector<8x256xi1>, vector<8x256xf32>
    %54 = vector.extract_strided_slice %1 {offsets = [0, 15], sizes = [8, 241], strides = [1, 1]} : vector<8x256xf32> to vector<8x241xf32>
    %cst_14 = arith.constant 0.000000e+00 : f32
    %55 = vector.broadcast %cst_14 : f32 to vector<8x15xf32>
    %56 = tpu.concatenate %54, %55 in 1 : vector<8x241xf32>, vector<8x15xf32> -> vector<8x256xf32>
    %cst_15 = arith.constant 0.000000e+00 : f32
    %57 = vector.shape_cast %20 : vector<1x256xi1> to vector<1x256xi1>
    %58 = vector.broadcast %57 : vector<1x256xi1> to vector<8x256xi1>
    %59 = vector.broadcast %cst_15 : f32 to vector<8x256xf32>
    %60 = arith.select %58, %56, %59 : vector<8x256xi1>, vector<8x256xf32>
    %61 = vector.extract_strided_slice %1 {offsets = [0, 16], sizes = [8, 240], strides = [1, 1]} : vector<8x256xf32> to vector<8x240xf32>
    %cst_16 = arith.constant 0.000000e+00 : f32
    %62 = vector.broadcast %cst_16 : f32 to vector<8x16xf32>
    %63 = tpu.concatenate %61, %62 in 1 : vector<8x240xf32>, vector<8x16xf32> -> vector<8x256xf32>
    %64 = vector.extract_strided_slice %1 {offsets = [0, 17], sizes = [8, 239], strides = [1, 1]} : vector<8x256xf32> to vector<8x239xf32>
    %cst_17 = arith.constant 0.000000e+00 : f32
    %65 = vector.broadcast %cst_17 : f32 to vector<8x17xf32>
    %66 = tpu.concatenate %64, %65 in 1 : vector<8x239xf32>, vector<8x17xf32> -> vector<8x256xf32>
    %cst_18 = arith.constant 0.000000e+00 : f32
    %67 = vector.shape_cast %22 : vector<1x256xi1> to vector<1x256xi1>
    %68 = vector.broadcast %67 : vector<1x256xi1> to vector<8x256xi1>
    %69 = vector.broadcast %cst_18 : f32 to vector<8x256xf32>
    %70 = arith.select %68, %66, %69 : vector<8x256xi1>, vector<8x256xf32>
    %71 = tpu.concatenate %29, %32, %39, %46, %1, %53, %60, %63, %70 in 0 : vector<8x256xf32>, vector<8x256xf32>, vector<8x256xf32>, vector<8x256xf32>, vector<8x256xf32>, vector<8x256xf32>, vector<8x256xf32>, vector<8x256xf32>, vector<8x256xf32> -> vector<72x256xf32>
    %c0_19 = arith.constant 0 : index
    %c0_20 = arith.constant 0 : index
    %72 = vector.load %arg2[%c0_19, %c0_20] : memref<8x72xf32, #tpu.memory_space<vmem>>, vector<8x72xf32>
    %cst_21 = arith.constant dense<0.000000e+00> : vector<8x256xf32>
    %73 = tpu.matmul %72, %71, %cst_21 {dimension_numbers = #tpu.dot_dimension_numbers<[1], [0], [0], [1], [0, 0, 1, 1], [], []>} : vector<8x72xf32>, vector<72x256xf32>, vector<8x256xf32> -> vector<8x256xf32>
    %c0_22 = arith.constant 0 : index
    %c0_23 = arith.constant 0 : index
    %74 = vector.load %arg3[%c0_22, %c0_23] : memref<8x1xf32, #tpu.memory_space<vmem>>, vector<8x1xf32>
    %75 = vector.broadcast %74 : vector<8x1xf32> to vector<8x256xf32>
    %76 = arith.addf %73, %75 : vector<8x256xf32>
    %cst_24 = arith.constant 0.000000e+00 : f32
    %77 = vector.broadcast %cst_24 : f32 to vector<8x256xf32>
    %78 = arith.maximumf %76, %77 : vector<8x256xf32>
    %cst_25 = arith.constant 0.000000e+00 : f32
    %79 = vector.broadcast %cst_25 : f32 to vector<8x17xf32>
    %80 = vector.extract_strided_slice %78 {offsets = [0, 0], sizes = [8, 239], strides = [1, 1]} : vector<8x256xf32> to vector<8x239xf32>
    %81 = tpu.concatenate %79, %80 in 1 : vector<8x17xf32>, vector<8x239xf32> -> vector<8x256xf32>
    %cst_26 = arith.constant 0.000000e+00 : f32
    %82 = vector.shape_cast %20 : vector<1x256xi1> to vector<1x256xi1>
    %83 = vector.broadcast %82 : vector<1x256xi1> to vector<8x256xi1>
    %84 = vector.broadcast %cst_26 : f32 to vector<8x256xf32>
    %85 = arith.select %83, %81, %84 : vector<8x256xi1>, vector<8x256xf32>
    %cst_27 = arith.constant 0.000000e+00 : f32
    %86 = vector.broadcast %cst_27 : f32 to vector<8x16xf32>
    %87 = vector.extract_strided_slice %78 {offsets = [0, 0], sizes = [8, 240], strides = [1, 1]} : vector<8x256xf32> to vector<8x240xf32>
    %88 = tpu.concatenate %86, %87 in 1 : vector<8x16xf32>, vector<8x240xf32> -> vector<8x256xf32>
    %cst_28 = arith.constant 0.000000e+00 : f32
    %89 = vector.broadcast %cst_28 : f32 to vector<8x15xf32>
    %90 = vector.extract_strided_slice %78 {offsets = [0, 0], sizes = [8, 241], strides = [1, 1]} : vector<8x256xf32> to vector<8x241xf32>
    %91 = tpu.concatenate %89, %90 in 1 : vector<8x15xf32>, vector<8x241xf32> -> vector<8x256xf32>
    %cst_29 = arith.constant 0.000000e+00 : f32
    %92 = vector.shape_cast %22 : vector<1x256xi1> to vector<1x256xi1>
    %93 = vector.broadcast %92 : vector<1x256xi1> to vector<8x256xi1>
    %94 = vector.broadcast %cst_29 : f32 to vector<8x256xf32>
    %95 = arith.select %93, %91, %94 : vector<8x256xi1>, vector<8x256xf32>
    %cst_30 = arith.constant 0.000000e+00 : f32
    %96 = vector.broadcast %cst_30 : f32 to vector<8x1xf32>
    %97 = vector.extract_strided_slice %78 {offsets = [0, 0], sizes = [8, 255], strides = [1, 1]} : vector<8x256xf32> to vector<8x255xf32>
    %98 = tpu.concatenate %96, %97 in 1 : vector<8x1xf32>, vector<8x255xf32> -> vector<8x256xf32>
    %cst_31 = arith.constant 0.000000e+00 : f32
    %99 = vector.shape_cast %20 : vector<1x256xi1> to vector<1x256xi1>
    %100 = vector.broadcast %99 : vector<1x256xi1> to vector<8x256xi1>
    %101 = vector.broadcast %cst_31 : f32 to vector<8x256xf32>
    %102 = arith.select %100, %98, %101 : vector<8x256xi1>, vector<8x256xf32>
    %103 = vector.extract_strided_slice %78 {offsets = [0, 1], sizes = [8, 255], strides = [1, 1]} : vector<8x256xf32> to vector<8x255xf32>
    %cst_32 = arith.constant 0.000000e+00 : f32
    %104 = vector.broadcast %cst_32 : f32 to vector<8x1xf32>
    %105 = tpu.concatenate %103, %104 in 1 : vector<8x255xf32>, vector<8x1xf32> -> vector<8x256xf32>
    %cst_33 = arith.constant 0.000000e+00 : f32
    %106 = vector.shape_cast %22 : vector<1x256xi1> to vector<1x256xi1>
    %107 = vector.broadcast %106 : vector<1x256xi1> to vector<8x256xi1>
    %108 = vector.broadcast %cst_33 : f32 to vector<8x256xf32>
    %109 = arith.select %107, %105, %108 : vector<8x256xi1>, vector<8x256xf32>
    %110 = vector.extract_strided_slice %78 {offsets = [0, 15], sizes = [8, 241], strides = [1, 1]} : vector<8x256xf32> to vector<8x241xf32>
    %cst_34 = arith.constant 0.000000e+00 : f32
    %111 = vector.broadcast %cst_34 : f32 to vector<8x15xf32>
    %112 = tpu.concatenate %110, %111 in 1 : vector<8x241xf32>, vector<8x15xf32> -> vector<8x256xf32>
    %cst_35 = arith.constant 0.000000e+00 : f32
    %113 = vector.shape_cast %20 : vector<1x256xi1> to vector<1x256xi1>
    %114 = vector.broadcast %113 : vector<1x256xi1> to vector<8x256xi1>
    %115 = vector.broadcast %cst_35 : f32 to vector<8x256xf32>
    %116 = arith.select %114, %112, %115 : vector<8x256xi1>, vector<8x256xf32>
    %117 = vector.extract_strided_slice %78 {offsets = [0, 16], sizes = [8, 240], strides = [1, 1]} : vector<8x256xf32> to vector<8x240xf32>
    %cst_36 = arith.constant 0.000000e+00 : f32
    %118 = vector.broadcast %cst_36 : f32 to vector<8x16xf32>
    %119 = tpu.concatenate %117, %118 in 1 : vector<8x240xf32>, vector<8x16xf32> -> vector<8x256xf32>
    %120 = vector.extract_strided_slice %78 {offsets = [0, 17], sizes = [8, 239], strides = [1, 1]} : vector<8x256xf32> to vector<8x239xf32>
    %cst_37 = arith.constant 0.000000e+00 : f32
    %121 = vector.broadcast %cst_37 : f32 to vector<8x17xf32>
    %122 = tpu.concatenate %120, %121 in 1 : vector<8x239xf32>, vector<8x17xf32> -> vector<8x256xf32>
    %cst_38 = arith.constant 0.000000e+00 : f32
    %123 = vector.shape_cast %22 : vector<1x256xi1> to vector<1x256xi1>
    %124 = vector.broadcast %123 : vector<1x256xi1> to vector<8x256xi1>
    %125 = vector.broadcast %cst_38 : f32 to vector<8x256xf32>
    %126 = arith.select %124, %122, %125 : vector<8x256xi1>, vector<8x256xf32>
    %127 = tpu.concatenate %85, %88, %95, %102, %78, %109, %116, %119, %126 in 0 : vector<8x256xf32>, vector<8x256xf32>, vector<8x256xf32>, vector<8x256xf32>, vector<8x256xf32>, vector<8x256xf32>, vector<8x256xf32>, vector<8x256xf32>, vector<8x256xf32> -> vector<72x256xf32>
    %c0_39 = arith.constant 0 : index
    %c0_40 = arith.constant 0 : index
    %128 = vector.load %arg4[%c0_39, %c0_40] : memref<8x72xf32, #tpu.memory_space<vmem>>, vector<8x72xf32>
    %cst_41 = arith.constant dense<0.000000e+00> : vector<8x256xf32>
    %129 = tpu.matmul %128, %127, %cst_41 {dimension_numbers = #tpu.dot_dimension_numbers<[1], [0], [0], [1], [0, 0, 1, 1], [], []>} : vector<8x72xf32>, vector<72x256xf32>, vector<8x256xf32> -> vector<8x256xf32>
    %c0_42 = arith.constant 0 : index
    %c0_43 = arith.constant 0 : index
    %130 = vector.load %arg5[%c0_42, %c0_43] : memref<8x1xf32, #tpu.memory_space<vmem>>, vector<8x1xf32>
    %131 = vector.broadcast %130 : vector<8x1xf32> to vector<8x256xf32>
    %132 = arith.addf %129, %131 : vector<8x256xf32>
    %cst_44 = arith.constant 0.000000e+00 : f32
    %133 = vector.broadcast %cst_44 : f32 to vector<8x256xf32>
    %134 = arith.maximumf %132, %133 : vector<8x256xf32>
    %135 = vector.extract_strided_slice %1 {offsets = [0, 0], sizes = [4, 256], strides = [1, 1]} : vector<8x256xf32> to vector<4x256xf32>
    %cst_45 = arith.constant 0.000000e+00 : f32
    %136 = vector.broadcast %cst_45 : f32 to vector<4x256xf32>
    %137 = arith.maximumf %135, %136 : vector<4x256xf32>
    %c0_46 = arith.constant 0 : index
    %c0_47 = arith.constant 0 : index
    %c0_48 = arith.constant 0 : index
    %138 = vector.load %arg6[%c0_46, %c0_47, %c0_48] : memref<1x12x256xf32, #tpu.memory_space<vmem>>, vector<1x4x256xf32>
    %139 = vector.shape_cast %138 : vector<1x4x256xf32> to vector<4x256xf32>
    %140 = vector.shape_cast %137 : vector<4x256xf32> to vector<1x4x256xf32>
    tpu.vector_store %arg6[%c0_46, %c0_47, %c0_48], %140 {strides = array<i32>} : memref<1x12x256xf32, #tpu.memory_space<vmem>>, vector<1x4x256xf32>,
    %c0_49 = arith.constant 0 : index
    %c4 = arith.constant 4 : index
    %c0_50 = arith.constant 0 : index
    %141 = vector.load %arg6[%c0_49, %c4, %c0_50] : memref<1x12x256xf32, #tpu.memory_space<vmem>>, vector<1x8x256xf32>
    %142 = vector.shape_cast %141 : vector<1x8x256xf32> to vector<8x256xf32>
    %143 = vector.shape_cast %134 : vector<8x256xf32> to vector<1x8x256xf32>
    tpu.vector_store %arg6[%c0_49, %c4, %c0_50], %143 {strides = array<i32>} : memref<1x12x256xf32, #tpu.memory_space<vmem>>, vector<1x8x256xf32>,
    return
  }
  func.func @transform_0(%arg0: i32) -> (i32, i32, i32) {
    %c0_i32 = arith.constant 0 : i32
    %c0_i32_0 = arith.constant 0 : i32
    %c0_i32_1 = arith.constant 0 : i32
    return %arg0, %c0_i32, %c0_i32_0 : i32, i32, i32
  }
  func.func @transform_1(%arg0: i32) -> (i32, i32) {
    %c0_i32 = arith.constant 0 : i32
    %c0_i32_0 = arith.constant 0 : i32
    %c0_i32_1 = arith.constant 0 : i32
    return %c0_i32, %c0_i32_0 : i32, i32
  }
  func.func @transform_2(%arg0: i32) -> (i32, i32) {
    %c0_i32 = arith.constant 0 : i32
    %c0_i32_0 = arith.constant 0 : i32
    %c0_i32_1 = arith.constant 0 : i32
    return %c0_i32, %c0_i32_0 : i32, i32
  }
  func.func @transform_3(%arg0: i32) -> (i32, i32) {
    %c0_i32 = arith.constant 0 : i32
    %c0_i32_0 = arith.constant 0 : i32
    %c0_i32_1 = arith.constant 0 : i32
    return %c0_i32, %c0_i32_0 : i32, i32
  }
  func.func @transform_4(%arg0: i32) -> (i32, i32) {
    %c0_i32 = arith.constant 0 : i32
    %c0_i32_0 = arith.constant 0 : i32
    %c0_i32_1 = arith.constant 0 : i32
    return %c0_i32, %c0_i32_0 : i32, i32
  }
  func.func @transform_5(%arg0: i32) -> (i32, i32, i32) {
    %c0_i32 = arith.constant 0 : i32
    %c0_i32_0 = arith.constant 0 : i32
    %c0_i32_1 = arith.constant 0 : i32
    return %arg0, %c0_i32, %c0_i32_0 : i32, i32, i32
  }
}

</mosaic_0001>

<llo_original>
// kernel: tpu_custom_call.1
$region0: #{tpu_custom_call.1}
  #allocation0 [shape = 'u32[]', space=smem, size = 0x4, offset = 0x4, fixed_abs, tag = 'smem constant byte address 0x4 - core index']
  #allocation1 [shape = 'u32[144,128]{1,0:T(1,128)}', space=vmem, size = 0x12000, scoped, tag = 'internal scratch']
  %s0 = inlined_call_operand.hbm [shape: f32[2,8,256], index: 0, kind: input, shape index: {}]
  %s1 = inlined_call_operand.vmem [shape: f32[8,72], index: 1, kind: input, shape index: {}]
  %s2 = inlined_call_operand.vmem [shape: f32[8,1], index: 2, kind: input, shape index: {}]
  %s3 = inlined_call_operand.vmem [shape: f32[8,72], index: 3, kind: input, shape index: {}]
  %s4 = inlined_call_operand.vmem [shape: f32[8,1], index: 4, kind: input, shape index: {}]
  %s5 = inlined_call_operand.vmem [shape: f32[2,12,256], index: 5, kind: output, shape index: {}]
  %s6 = sld [smem:[#allocation0]]
  $region57: #{tpu_custom_call.1} parent=0
    _
  %s8 = ssub.s32 1, %s6
  %s9 = scalar_select 0, %s8, %s6
  $region1: #{tpu_custom_call.1} parent=0
    #allocation2 [shape = 'u8[16384]{0}', space=vmem, size = 0x4000, scoped, tag = 'input window, operand 0']
    #allocation3 [shape = 's32[2]{0}', space=sflag, size = 0x8, scoped, tag = 'scoped memory for tpu_custom_call.1']
    %10 = vsyncpa [#allocation3], 0
    %s11 = scalar_lea.sflag [#allocation3], 1
    %12 = vsyncpa %s11, 0
    loop: start=0, step=1, limit=4
    $region2: #{tpu_custom_call.1} parent=1 // loop_pre_header
      _
    $region3: #{tpu_custom_call.1} parent=1 // loop_header
      %s14 = sphi 0, %s18
      %p15 = scmp.ge.s32.totalorder %s14, 4
      %s24 = sphi 0, %s26
      %s27 = sphi 0, %s24
      %s28 = sphi 0, %s27
      %s44 = sphi 0, %s28
      %s48 = sphi 0, %s48
      %s50 = sphi 0, %s48
      %s51 = sphi 0, %s50
      %s65 = sphi 0, %s51
      %s69 = sphi 0, %s69
      %s71 = sphi 0, %s69
      %s72 = sphi 0, %s71
      %s86 = sphi 0, %s72
      %s90 = sphi 0, %s90
      %s92 = sphi 0, %s90
      %s93 = sphi 0, %s92
      %s107 = sphi 0, %s93
      %s111 = sphi 0, %s111
      %s113 = sphi 0, %s111
      %s114 = sphi 0, %s113
      %s128 = sphi 0, %s114
      %s134 = sphi 0, %s136
      %s137 = sphi 0, %s134
      %s138 = sphi 0, %s137
      %s154 = sphi 0, %s138
    $region4: #{tpu_custom_call.1} parent=1 // loop_header_branch
      %17 = sbr.rel (%p15) target = $region8
    $region5: #{tpu_custom_call.1} parent=1 // loop_body
      %s19 = ssub.s32 %s14, 1
      %s20 = ssub.s32 %s14, 2
      %s21 = sadd.s32 %s14, 1
      %s22 = ssub.s32 %s14, %s21
      %p23 = scmp.eq.s32.totalorder %s22, 0
      %s25 = sadd.s32 %s24, 1
      %s26 = scalar_select %p23, %s24, %s25
      %p29 = pneg %p23
      %p30 = scmp.eq.s32.totalorder %s14, 1
      %p31 = por %p29, %p30
      %p32 = scmp.ne.s32.totalorder %s24, %s27
      %p33 = scmp.eq.s32.totalorder %s14, 0
      %p34 = por %p32, %p33
      %p35 = scmp.ne.s32.totalorder %s24, %s27
      %p36 = scmp.eq.s32.totalorder %s19, 1
      %p37 = por %p35, %p36
      %p38 = scmp.ne.s32.totalorder %s27, %s28
      %p39 = scmp.eq.s32.totalorder %s19, 0
      %p40 = por %p38, %p39
      %p41 = scmp.ne.s32.totalorder %s27, %s28
      %p42 = scmp.eq.s32.totalorder %s20, 1
      %p43 = por %p41, %p42
      %p45 = scmp.ne.s32.totalorder %s28, %s44
      %p46 = scmp.eq.s32.totalorder %s20, 0
      %p47 = por %p45, %p46
      %s49 = sadd.s32 %s48, 1
      %p52 = scmp.eq.s32.totalorder %s14, 1
      %p53 = scmp.ne.s32.totalorder %s48, %s50
      %p54 = scmp.eq.s32.totalorder %s14, 0
      %p55 = por %p53, %p54
      %p56 = scmp.ne.s32.totalorder %s48, %s50
      %p57 = scmp.eq.s32.totalorder %s19, 1
      %p58 = por %p56, %p57
      %p59 = scmp.ne.s32.totalorder %s50, %s51
      %p60 = scmp.eq.s32.totalorder %s19, 0
      %p61 = por %p59, %p60
      %p62 = scmp.ne.s32.totalorder %s50, %s51
      %p63 = scmp.eq.s32.totalorder %s20, 1
      %p64 = por %p62, %p63
      %p66 = scmp.ne.s32.totalorder %s51, %s65
      %p67 = scmp.eq.s32.totalorder %s20, 0
      %p68 = por %p66, %p67
      %s70 = sadd.s32 %s69, 1
      %p73 = scmp.eq.s32.totalorder %s14, 1
      %p74 = scmp.ne.s32.totalorder %s69, %s71
      %p75 = scmp.eq.s32.totalorder %s14, 0
      %p76 = por %p74, %p75
      %p77 = scmp.ne.s32.totalorder %s69, %s71
      %p78 = scmp.eq.s32.totalorder %s19, 1
      %p79 = por %p77, %p78
      %p80 = scmp.ne.s32.totalorder %s71, %s72
      %p81 = scmp.eq.s32.totalorder %s19, 0
      %p82 = por %p80, %p81
      %p83 = scmp.ne.s32.totalorder %s71, %s72
      %p84 = scmp.eq.s32.totalorder %s20, 1
      %p85 = por %p83, %p84
      %p87 = scmp.ne.s32.totalorder %s72, %s86
      %p88 = scmp.eq.s32.totalorder %s20, 0
      %p89 = por %p87, %p88
      %s91 = sadd.s32 %s90, 1
      %p94 = scmp.eq.s32.totalorder %s14, 1
      %p95 = scmp.ne.s32.totalorder %s90, %s92
      %p96 = scmp.eq.s32.totalorder %s14, 0
      %p97 = por %p95, %p96
      %p98 = scmp.ne.s32.totalorder %s90, %s92
      %p99 = scmp.eq.s32.totalorder %s19, 1
      %p100 = por %p98, %p99
      %p101 = scmp.ne.s32.totalorder %s92, %s93
      %p102 = scmp.eq.s32.totalorder %s19, 0
      %p103 = por %p101, %p102
      %p104 = scmp.ne.s32.totalorder %s92, %s93
      %p105 = scmp.eq.s32.totalorder %s20, 1
      %p106 = por %p104, %p105
      %p108 = scmp.ne.s32.totalorder %s93, %s107
      %p109 = scmp.eq.s32.totalorder %s20, 0
      %p110 = por %p108, %p109
      %s112 = sadd.s32 %s111, 1
      %p115 = scmp.eq.s32.totalorder %s14, 1
      %p116 = scmp.ne.s32.totalorder %s111, %s113
      %p117 = scmp.eq.s32.totalorder %s14, 0
      %p118 = por %p116, %p117
      %p119 = scmp.ne.s32.totalorder %s111, %s113
      %p120 = scmp.eq.s32.totalorder %s19, 1
      %p121 = por %p119, %p120
      %p122 = scmp.ne.s32.totalorder %s113, %s114
      %p123 = scmp.eq.s32.totalorder %s19, 0
      %p124 = por %p122, %p123
      %p125 = scmp.ne.s32.totalorder %s113, %s114
      %p126 = scmp.eq.s32.totalorder %s20, 1
      %p127 = por %p125, %p126
      %p129 = scmp.ne.s32.totalorder %s114, %s128
      %p130 = scmp.eq.s32.totalorder %s20, 0
      %p131 = por %p129, %p130
      %s132 = ssub.s32 %s14, %s21
      %p133 = scmp.eq.s32.totalorder %s132, 0
      %s135 = sadd.s32 %s134, 1
      %s136 = scalar_select %p133, %s134, %s135
      %p139 = pneg %p133
      %p140 = scmp.eq.s32.totalorder %s14, 1
      %p141 = por %p139, %p140
      %p142 = scmp.ne.s32.totalorder %s134, %s137
      %p143 = scmp.eq.s32.totalorder %s14, 0
      %p144 = por %p142, %p143
      %p145 = scmp.ne.s32.totalorder %s134, %s137
      %p146 = scmp.eq.s32.totalorder %s19, 1
      %p147 = por %p145, %p146
      %p148 = scmp.ne.s32.totalorder %s137, %s138
      %p149 = scmp.eq.s32.totalorder %s19, 0
      %p150 = por %p148, %p149
      %p151 = scmp.ne.s32.totalorder %s137, %s138
      %p152 = scmp.eq.s32.totalorder %s20, 1
      %p153 = por %p151, %p152
      %p155 = scmp.ne.s32.totalorder %s138, %s154
      %p156 = scmp.eq.s32.totalorder %s20, 0
      %p157 = por %p155, %p156
      %p158 = scmp.le.s32.totalorder 1, %s14
      %p159 = scmp.lt.s32.totalorder %s14, 3
      %p160 = pnand %p158, %p159
      %p161 = pneg %p160
      // Predicated region
      $region9: #{tpu_custom_call.1} parent=5 // pred_check
        _
      $region10: #{tpu_custom_call.1} parent=5 // pred_check_branch
        %163 = sbr.rel (%p160) target = $region12
      $region11: #{tpu_custom_call.1} parent=5 // pred_region
        %s164 = ssub.s32 %s14, 1
        // Predicated region
        $region13: #{tpu_custom_call.1} parent=11 // pred_check
          %p165 = pneg %p61
        $region14: #{tpu_custom_call.1} parent=11 // pred_check_branch
          %167 = sbr.rel (%p165) target = $region16
        $region15: #{tpu_custom_call.1} parent=11 // pred_region
          _
        $region16: #{tpu_custom_call.1} parent=11 // pred_fallthru
          _
        // Predicated region
        $region17: #{tpu_custom_call.1} parent=11 // pred_check
          %p168 = pneg %p82
        $region18: #{tpu_custom_call.1} parent=11 // pred_check_branch
          %170 = sbr.rel (%p168) target = $region20
        $region19: #{tpu_custom_call.1} parent=11 // pred_region
          _
        $region20: #{tpu_custom_call.1} parent=11 // pred_fallthru
          _
        // Predicated region
        $region21: #{tpu_custom_call.1} parent=11 // pred_check
          %p171 = pneg %p103
        $region22: #{tpu_custom_call.1} parent=11 // pred_check_branch
          %173 = sbr.rel (%p171) target = $region24
        $region23: #{tpu_custom_call.1} parent=11 // pred_region
          _
        $region24: #{tpu_custom_call.1} parent=11 // pred_fallthru
          _
        // Predicated region
        $region25: #{tpu_custom_call.1} parent=11 // pred_check
          %p174 = pneg %p124
        $region26: #{tpu_custom_call.1} parent=11 // pred_check_branch
          %176 = sbr.rel (%p174) target = $region28
        $region27: #{tpu_custom_call.1} parent=11 // pred_region
          _
        $region28: #{tpu_custom_call.1} parent=11 // pred_fallthru
          _
      $region12: #{tpu_custom_call.1} parent=5 // pred_fallthru
        _
      %p177 = scmp.lt.s32.totalorder %s14, 2
      // Predicated region
      $region29: #{tpu_custom_call.1} parent=5 // pred_check
        %p178 = pneg %p177
      $region30: #{tpu_custom_call.1} parent=5 // pred_check_branch
        %180 = sbr.rel (%p178) target = $region32
      $region31: #{tpu_custom_call.1} parent=5 // pred_region
        // Predicated region
        $region33: #{tpu_custom_call.1} parent=31 // pred_check
          %p181 = pneg %p34
        $region34: #{tpu_custom_call.1} parent=31 // pred_check_branch
          %183 = sbr.rel (%p181) target = $region36
        $region35: #{tpu_custom_call.1} parent=31 // pred_region
          %s184 = sand.u32 %s24, 1
          %s185 = scalar_lea.sflag [#allocation3], %s184
          %s186 = sand.u32 %s24, 1
          %s187 = smul.addr %s186, 16
          %s188 = scalar_lea.vmem [#allocation2], %s187
          %s190 = ssub.s32 256, 256
          %191 = vsyncadd %s185, %s190
          %s192 = smul.addr %s14, 2
          %s193 = smul.addr %s192, 128
          %s194 = scalar_lea.hbm %s0, %s193
          %s196 = sshll.u32 %s188, 4
          %s197 = int_to_ptr.vmem [resolvable:$true] %s196
          %199 = dma.hbm_to_vmem [thread:$0]  %s194, 256, %s197, %s185
        $region36: #{tpu_custom_call.1} parent=31 // pred_fallthru
          _
      $region32: #{tpu_custom_call.1} parent=5 // pred_fallthru
        _
      %p200 = scmp.le.s32.totalorder 1, %s14
      %p201 = scmp.lt.s32.totalorder %s14, 3
      %p202 = pnand %p200, %p201
      %p203 = pneg %p202
      // Predicated region
      $region37: #{tpu_custom_call.1} parent=5 // pred_check
        _
      $region38: #{tpu_custom_call.1} parent=5 // pred_check_branch
        %205 = sbr.rel (%p202) target = $region40
      $region39: #{tpu_custom_call.1} parent=5 // pred_region
        %s206 = ssub.s32 %s14, 1
        %s207 = sand.u32 %s27, 1
        %s208 = scalar_lea.sflag [#allocation3], %s207
        %s209 = sand.u32 %s27, 1
        %s210 = smul.addr %s209, 16
        %s211 = scalar_lea.vmem [#allocation2], %s210
        // Predicated region
        $region41: #{tpu_custom_call.1} parent=39 // pred_check
          %p212 = pneg %p40
        $region42: #{tpu_custom_call.1} parent=39 // pred_check_branch
          %214 = sbr.rel (%p212) target = $region44
        $region43: #{tpu_custom_call.1} parent=39 // pred_region
          %215 = dma.done %s208, 256
        $region44: #{tpu_custom_call.1} parent=39 // pred_fallthru
          _
        %s216 = sand.u32 %s27, 1
        %s217 = scalar_lea.sflag [#allocation3], %s216
        %s218 = sand.u32 %s27, 1
        %s219 = smul.addr %s218, 16
        %s220 = scalar_lea.vmem [#allocation2], %s219
        %p221 = pneg %p40
        %p222 = pneg %p37
        %p223 = pneg %p61
        %p224 = pneg %p58
        %p225 = pneg %p82
        %p226 = pneg %p79
        %p227 = pneg %p103
        %p228 = pneg %p100
        %p229 = pneg %p124
        %p230 = pneg %p121
        %p231 = pneg %p150
        %p232 = pneg %p147
        %p233 = scmp.lt.s32.totalorder %s19, 1
        %s234 = scalar_select %p233, %s19, 1
        %s235 = smul.addr %s234, 4
        %s236 = smul.addr %s235, 8
        %s237 = scalar_lea.vmem %s5, %s236
        %p238 = scmp.lt.s32.totalorder %s19, 1
        %s239 = scalar_select %p238, %s19, 1
        %s240 = smul.addr %s239, 4
        %s241 = smul.addr %s240, 8
        %s242 = scalar_lea.vmem %s5, %s241
        %v243 = vld [vmem:[%s211] sm:$0xff]
        %v244 = vld [vmem:[%s211 + $0x8] sm:$0xff]
        %v245 = vlaneseq
        %v246 = vand.u32 %v245, 127
        %v247 = vadd.s32 %v246, 128
        %vm248 = vcmp.lt.s32.totalorder %v246, 0
        %v249 = vsub.s32 0, %v246
        %v250 = vsel %vm248, %v249, %v246
        %v251 = vshrl.u32 %v250, 4
        %v252 = vand.u32 %v250, 15
        %v253 = vsub.s32 0, %v252
        %v254 = vsel %vm248, %v253, %v252
        %vm255 = vcmp.lt.s32.totalorder %v247, 0
        %v256 = vsub.s32 0, %v247
        %v257 = vsel %vm255, %v256, %v247
        %v258 = vshrl.u32 %v257, 4
        %v259 = vand.u32 %v257, 15
        %v260 = vsub.s32 0, %v259
        %v261 = vsel %vm255, %v260, %v259
        %vm262 = vcmp.ne.s32.totalorder %v254, 0
        %vm263 = vcmp.ne.s32.totalorder %v261, 0
        %vm264 = vcmp.lt.s32.totalorder %v254, 0
        %vm265 = vcmp.lt.s32.totalorder %v261, 0
        %vm266 = vmand %vm264, %vm262
        %vm267 = vmand %vm265, %vm263
        %v268 = vadd.s32 %v254, 16
        %v269 = vadd.s32 %v261, 16
        %v270 = vsel %vm266, %v268, %v254
        %v271 = vsel %vm267, %v269, %v261
        %vm272 = vcmp.ge.s32.totalorder %v270, 1
        %vm273 = vcmp.ge.s32.totalorder %v271, 1
        %vm274 = vcmp.lt.s32.totalorder %v270, 15
        %vm275 = vcmp.lt.s32.totalorder %v271, 15
        %278 = vrot.lane.b32.xlu0 %v243, 17
        %v279 = vpop.permute.xlu0 %278
        %280 = vrot.lane.b32.xlu0 %v244, 17
        %v281 = vpop.permute.xlu0 %280
        %vm282 = vcmask 138240
        %v283 = vsel %vm282, %v279, %v281
        %v286 = vsel %vm282, 0.0, %v279
        %v287 = vsel %vm272, 1, 0
        %v288 = vsel %vm273, 1, 0
        %vm289 = vcmp.eq.s32.totalorder %v287, 1
        %vm290 = vcmp.eq.s32.totalorder %v288, 1
        %v291 = vsel %vm289, %v286, 0.0
        %v292 = vsel %vm290, %v283, 0.0
        %293 = vrot.lane.b32.xlu0 %v243, 16
        %v294 = vpop.permute.xlu0 %293
        %295 = vrot.lane.b32.xlu0 %v244, 16
        %v296 = vpop.permute.xlu0 %295
        %vm297 = vcmask 130048
        %v298 = vsel %vm297, %v294, %v296
        %v301 = vsel %vm297, 0.0, %v294
        %302 = vrot.lane.b32.xlu0 %v243, 15
        %v303 = vpop.permute.xlu0 %302
        %304 = vrot.lane.b32.xlu0 %v244, 15
        %v305 = vpop.permute.xlu0 %304
        %vm306 = vcmask 121856
        %v307 = vsel %vm306, %v303, %v305
        %v310 = vsel %vm306, 0.0, %v303
        %v311 = vsel %vm274, 1, 0
        %v312 = vsel %vm275, 1, 0
        %vm313 = vcmp.eq.s32.totalorder %v311, 1
        %vm314 = vcmp.eq.s32.totalorder %v312, 1
        %v315 = vsel %vm313, %v310, 0.0
        %v316 = vsel %vm314, %v307, 0.0
        %317 = vrot.lane.b32.xlu0 %v243, 1
        %v318 = vpop.permute.xlu0 %317
        %319 = vrot.lane.b32.xlu0 %v244, 1
        %v320 = vpop.permute.xlu0 %319
        %vm321 = vcmask 7168
        %v322 = vsel %vm321, %v318, %v320
        %v325 = vsel %vm321, 0.0, %v318
        %v326 = vsel %vm289, %v325, 0.0
        %v327 = vsel %vm290, %v322, 0.0
        %328 = vrot.lane.b32.xlu0 %v243, 127
        %v329 = vpop.permute.xlu0 %328
        %330 = vrot.lane.b32.xlu0 %v244, 127
        %v331 = vpop.permute.xlu0 %330
        %vm332 = vcmask 1039360
        %v333 = vsel %vm332, %v329, %v331
        %v336 = vsel %vm332, %v331, 0.0
        %v337 = vsel %vm313, %v333, 0.0
        %v338 = vsel %vm314, %v336, 0.0
        %339 = vrot.lane.b32.xlu0 %v243, 113
        %v340 = vpop.permute.xlu0 %339
        %341 = vrot.lane.b32.xlu0 %v244, 113
        %v342 = vpop.permute.xlu0 %341
        %vm343 = vcmask 924672
        %v344 = vsel %vm343, %v340, %v342
        %v347 = vsel %vm343, %v342, 0.0
        %v348 = vsel %vm289, %v344, 0.0
        %v349 = vsel %vm290, %v347, 0.0
        %350 = vrot.lane.b32.xlu0 %v243, 112
        %v351 = vpop.permute.xlu0 %350
        %352 = vrot.lane.b32.xlu0 %v244, 112
        %v353 = vpop.permute.xlu0 %352
        %vm354 = vcmask 916480
        %v355 = vsel %vm354, %v351, %v353
        %v358 = vsel %vm354, %v353, 0.0
        %359 = vrot.lane.b32.xlu0 %v243, 111
        %v360 = vpop.permute.xlu0 %359
        %361 = vrot.lane.b32.xlu0 %v244, 111
        %v362 = vpop.permute.xlu0 %361
        %vm363 = vcmask 908288
        %v364 = vsel %vm363, %v360, %v362
        %v367 = vsel %vm363, %v362, 0.0
        %v368 = vsel %vm313, %v364, 0.0
        %v369 = vsel %vm314, %v367, 0.0
        %v370 = vld [vmem:[%s1] sm:$0xff]
        %v371 = vld [vmem:[%s2] sm:$0xff]
        %373 = vset.pattern.permute.xlu0 0
        %374 = vperm.xlu0 %373, %v371
        %v375 = vpop.permute.xlu0 %374
        %vm377 = vcmask 588800
        %v379 = vsel %vm377, %v370, 0
        %381 = vmatprep.subr.mxu0 %v292
        %382 = vmatpush1.msra.mxu0 %v291
        %383 = vmatprep.subr.mxu0 %v298
        %384 = vmatpush1.msra.mxu0 %v301
        %385 = vmatprep.subr.mxu0 %v316
        %386 = vmatpush1.msra.mxu0 %v315
        %387 = vmatprep.subr.mxu0 %v327
        %388 = vmatpush1.msra.mxu0 %v326
        %389 = vmatprep.subr.mxu0 %v244
        %390 = vmatpush1.msra.mxu0 %v243
        %391 = vmatprep.subr.mxu0 %v338
        %392 = vmatpush1.msra.mxu0 %v337
        %393 = vmatprep.subr.mxu0 %v349
        %394 = vmatpush1.msra.mxu0 %v348
        %395 = vmatprep.subr.mxu0 %v358
        %396 = vmatpush1.msra.mxu0 %v355
        %397 = vmatprep.subr.mxu0 %v369
        %398 = vmatpush1.msra.mxu0 %v368
        %399 = vmatprep.subr.mxu0 0.0
        %400 = vmatpush1.msra.mxu0 0.0
        %401 = vmatprep.subr.mxu0 0.0
        %402 = vmatpush1.msra.mxu0 0.0
        %403 = vmatprep.subr.mxu0 0.0
        %404 = vmatpush1.msra.mxu0 0.0
        %405 = vmatprep.subr.mxu0 0.0
        %406 = vmatpush1.msra.mxu0 0.0
        %407 = vmatprep.subr.mxu0 0.0
        %408 = vmatpush1.msra.mxu0 0.0
        %409 = vmatprep.subr.mxu0 0.0
        %410 = vmatpush1.msra.mxu0 0.0
        %411 = vmatprep.subr.mxu0 0.0
        %412 = vmatpush1.msra.mxu0 0.0
        %413 = vmatprep.subr.mxu0 0.0
        %414 = vmatpush1.msra.mxu0 0.0
        %415 = vmatprep.subr.mxu0 0.0
        %416 = vmatpush1.msra.mxu0 0.0
        %417 = vmatprep.subr.mxu0 0.0
        %418 = vmatpush1.msra.mxu0 0.0
        %419 = vmatprep.subr.mxu0 0.0
        %420 = vmatpush1.msra.mxu0 0.0
        %421 = vmatprep.subr.mxu0 0.0
        %422 = vmatpush1.msra.mxu0 0.0
        %423 = vmatprep.subr.mxu0 0.0
        %424 = vmatpush1.msra.mxu0 0.0
        %425 = vmatprep.subr.mxu0 0.0
        %426 = vmatpush1.msra.mxu0 0.0
        %427 = vmatprep.subr.mxu0 0.0
        %428 = vmatpush1.msra.mxu0 0.0
        %429 = vmatprep.subr.mxu0 0.0
        %430 = vmatpush1.msra.mxu0 0.0
        %431 = vmatprep.subr.mxu0 0.0
        %432 = vmatpush1.msra.mxu0 0.0
        %433 = vmatprep.subr.mxu0 0.0
        %434 = vmatpush1.msra.mxu0 0.0
        %435 = vmatprep.subr.mxu0 0.0
        %436 = vmatpush1.msra.mxu0 0.0
        %437 = vmatprep.subr.mxu0 0.0
        %438 = vmatpush1.msra.mxu0 0.0
        %439 = vmatprep.subr.mxu0 0.0
        %440 = vmatpush1.msra.mxu0 0.0
        %441 = vmatprep.subr.mxu0 0.0
        %442 = vmatpush1.msra.mxu0 0.0
        %443 = vmatprep.subr.mxu0 0.0
        %444 = vmatpush1.msra.mxu0 0.0
        %445 = vmatprep.mubr.f32.mxu0 0.0
        %446 = vmatmul.mubr.f32.gmra.mrb[0].mxu0 %v379
        %v447 = vpop.f32.mrb[0].mxu0
        %v448 = vadd.f32 %v375, %v447
        %v449 = vpop.f32.mrb[0].mxu0
        %v450 = vadd.f32 %v375, %v449
        %451 = vdwg.mxu0
        %v452 = vmax.f32 %v448, 0.0
        %v453 = vmax.f32 %v450, 0.0
        %456 = vrot.lane.b32.xlu0 %v452, 17
        %v457 = vpop.permute.xlu0 %456
        %458 = vrot.lane.b32.xlu0 %v453, 17
        %v459 = vpop.permute.xlu0 %458
        %v460 = vsel %vm282, %v457, %v459
        %v463 = vsel %vm282, 0.0, %v457
        %v464 = vsel %vm289, %v463, 0.0
        %v465 = vsel %vm290, %v460, 0.0
        %466 = vrot.lane.b32.xlu0 %v452, 16
        %v467 = vpop.permute.xlu0 %466
        %468 = vrot.lane.b32.xlu0 %v453, 16
        %v469 = vpop.permute.xlu0 %468
        %v470 = vsel %vm297, %v467, %v469
        %v473 = vsel %vm297, 0.0, %v467
        %474 = vrot.lane.b32.xlu0 %v452, 15
        %v475 = vpop.permute.xlu0 %474
        %476 = vrot.lane.b32.xlu0 %v453, 15
        %v477 = vpop.permute.xlu0 %476
        %v478 = vsel %vm306, %v475, %v477
        %v481 = vsel %vm306, 0.0, %v475
        %v482 = vsel %vm313, %v481, 0.0
        %v483 = vsel %vm314, %v478, 0.0
        %484 = vrot.lane.b32.xlu0 %v452, 1
        %v485 = vpop.permute.xlu0 %484
        %486 = vrot.lane.b32.xlu0 %v453, 1
        %v487 = vpop.permute.xlu0 %486
        %v488 = vsel %vm321, %v485, %v487
        %v491 = vsel %vm321, 0.0, %v485
        %v492 = vsel %vm289, %v491, 0.0
        %v493 = vsel %vm290, %v488, 0.0
        %494 = vrot.lane.b32.xlu0 %v452, 127
        %v495 = vpop.permute.xlu0 %494
        %496 = vrot.lane.b32.xlu0 %v453, 127
        %v497 = vpop.permute.xlu0 %496
        %v498 = vsel %vm332, %v495, %v497
        %v501 = vsel %vm332, %v497, 0.0
        %v502 = vsel %vm313, %v498, 0.0
        %v503 = vsel %vm314, %v501, 0.0
        %504 = vrot.lane.b32.xlu0 %v452, 113
        %v505 = vpop.permute.xlu0 %504
        %506 = vrot.lane.b32.xlu0 %v453, 113
        %v507 = vpop.permute.xlu0 %506
        %v508 = vsel %vm343, %v505, %v507
        %v511 = vsel %vm343, %v507, 0.0
        %v512 = vsel %vm289, %v508, 0.0
        %v513 = vsel %vm290, %v511, 0.0
        %514 = vrot.lane.b32.xlu0 %v452, 112
        %v515 = vpop.permute.xlu0 %514
        %516 = vrot.lane.b32.xlu0 %v453, 112
        %v517 = vpop.permute.xlu0 %516
        %v518 = vsel %vm354, %v515, %v517
        %v521 = vsel %vm354, %v517, 0.0
        %522 = vrot.lane.b32.xlu0 %v452, 111
        %v523 = vpop.permute.xlu0 %522
        %524 = vrot.lane.b32.xlu0 %v453, 111
        %v525 = vpop.permute.xlu0 %524
        %v526 = vsel %vm363, %v523, %v525
        %v529 = vsel %vm363, %v525, 0.0
        %v530 = vsel %vm313, %v526, 0.0
        %v531 = vsel %vm314, %v529, 0.0
        %v532 = vld [vmem:[%s3] sm:$0xff]
        %v533 = vld [vmem:[%s4] sm:$0xff]
        %535 = vset.pattern.permute.xlu0 0
        %536 = vperm.xlu0 %535, %v533
        %v537 = vpop.permute.xlu0 %536
        %v540 = vsel %vm377, %v532, 0
        %542 = vmatprep.subr.mxu0 %v465
        %543 = vmatpush1.msra.mxu0 %v464
        %544 = vmatprep.subr.mxu0 %v470
        %545 = vmatpush1.msra.mxu0 %v473
        %546 = vmatprep.subr.mxu0 %v483
        %547 = vmatpush1.msra.mxu0 %v482
        %548 = vmatprep.subr.mxu0 %v493
        %549 = vmatpush1.msra.mxu0 %v492
        %550 = vmatprep.subr.mxu0 %v453
        %551 = vmatpush1.msra.mxu0 %v452
        %552 = vmatprep.subr.mxu0 %v503
        %553 = vmatpush1.msra.mxu0 %v502
        %554 = vmatprep.subr.mxu0 %v513
        %555 = vmatpush1.msra.mxu0 %v512
        %556 = vmatprep.subr.mxu0 %v521
        %557 = vmatpush1.msra.mxu0 %v518
        %558 = vmatprep.subr.mxu0 %v531
        %559 = vmatpush1.msra.mxu0 %v530
        %560 = vmatprep.subr.mxu0 0.0
        %561 = vmatpush1.msra.mxu0 0.0
        %562 = vmatprep.subr.mxu0 0.0
        %563 = vmatpush1.msra.mxu0 0.0
        %564 = vmatprep.subr.mxu0 0.0
        %565 = vmatpush1.msra.mxu0 0.0
        %566 = vmatprep.subr.mxu0 0.0
        %567 = vmatpush1.msra.mxu0 0.0
        %568 = vmatprep.subr.mxu0 0.0
        %569 = vmatpush1.msra.mxu0 0.0
        %570 = vmatprep.subr.mxu0 0.0
        %571 = vmatpush1.msra.mxu0 0.0
        %572 = vmatprep.subr.mxu0 0.0
        %573 = vmatpush1.msra.mxu0 0.0
        %574 = vmatprep.subr.mxu0 0.0
        %575 = vmatpush1.msra.mxu0 0.0
        %576 = vmatprep.subr.mxu0 0.0
        %577 = vmatpush1.msra.mxu0 0.0
        %578 = vmatprep.subr.mxu0 0.0
        %579 = vmatpush1.msra.mxu0 0.0
        %580 = vmatprep.subr.mxu0 0.0
        %581 = vmatpush1.msra.mxu0 0.0
        %582 = vmatprep.subr.mxu0 0.0
        %583 = vmatpush1.msra.mxu0 0.0
        %584 = vmatprep.subr.mxu0 0.0
        %585 = vmatpush1.msra.mxu0 0.0
        %586 = vmatprep.subr.mxu0 0.0
        %587 = vmatpush1.msra.mxu0 0.0
        %588 = vmatprep.subr.mxu0 0.0
        %589 = vmatpush1.msra.mxu0 0.0
        %590 = vmatprep.subr.mxu0 0.0
        %591 = vmatpush1.msra.mxu0 0.0
        %592 = vmatprep.subr.mxu0 0.0
        %593 = vmatpush1.msra.mxu0 0.0
        %594 = vmatprep.subr.mxu0 0.0
        %595 = vmatpush1.msra.mxu0 0.0
        %596 = vmatprep.subr.mxu0 0.0
        %597 = vmatpush1.msra.mxu0 0.0
        %598 = vmatprep.subr.mxu0 0.0
        %599 = vmatpush1.msra.mxu0 0.0
        %600 = vmatprep.subr.mxu0 0.0
        %601 = vmatpush1.msra.mxu0 0.0
        %602 = vmatprep.subr.mxu0 0.0
        %603 = vmatpush1.msra.mxu0 0.0
        %604 = vmatprep.subr.mxu0 0.0
        %605 = vmatpush1.msra.mxu0 0.0
        %606 = vmatprep.mubr.f32.mxu0 0.0
        %607 = vmatmul.mubr.f32.gmra.mrb[0].mxu0 %v540
        %v608 = vpop.f32.mrb[0].mxu0
        %v609 = vadd.f32 %v537, %v608
        %v610 = vpop.f32.mrb[0].mxu0
        %v611 = vadd.f32 %v537, %v610
        %612 = vdwg.mxu0
        %v613 = vmax.f32 %v609, 0.0
        %v614 = vmax.f32 %v611, 0.0
        %v615 = vmax.f32 %v243, 0.0
        %v616 = vmax.f32 %v244, 0.0
        %617 = vst [vmem:[%s242] sm:$0xf] %v615
        %618 = vst [vmem:[%s242 + $0x8] sm:$0xf] %v616
        %v621 = vrot.slane %v613, 4
        %v622 = vrot.slane %v614, 4
        %625 = vst [vmem:[%s242] sm:$0xf0] %v621
        %626 = vst [vmem:[%s242 + $0x8] sm:$0xf0] %v622
        %627 = vst [vmem:[%s242 + $0x10] sm:$0xf] %v621
        %628 = vst [vmem:[%s242 + $0x18] sm:$0xf] %v622
        %p629 = scmp.lt.s32.totalorder %s19, 1
        %s630 = scalar_select %p629, %s19, 1
        %s631 = smul.addr %s630, 4
        %s632 = smul.addr %s631, 8
        %s633 = scalar_lea.vmem %s5, %s632
        // Predicated region
        $region45: #{tpu_custom_call.1} parent=39 // pred_check
          %p634 = pneg %p147
        $region46: #{tpu_custom_call.1} parent=39 // pred_check_branch
          %636 = sbr.rel (%p634) target = $region48
        $region47: #{tpu_custom_call.1} parent=39 // pred_region
          _
        $region48: #{tpu_custom_call.1} parent=39 // pred_fallthru
          _
      $region40: #{tpu_custom_call.1} parent=5 // pred_fallthru
        _
      %p637 = scmp.le.s32.totalorder 2, %s14
      // Predicated region
      $region49: #{tpu_custom_call.1} parent=5 // pred_check
        %p638 = pneg %p637
      $region50: #{tpu_custom_call.1} parent=5 // pred_check_branch
        %640 = sbr.rel (%p638) target = $region52
      $region51: #{tpu_custom_call.1} parent=5 // pred_region
        %s641 = ssub.s32 %s14, 2
        // Predicated region
        $region53: #{tpu_custom_call.1} parent=51 // pred_check
          %p642 = pneg %p153
        $region54: #{tpu_custom_call.1} parent=51 // pred_check_branch
          %644 = sbr.rel (%p642) target = $region56
        $region55: #{tpu_custom_call.1} parent=51 // pred_region
          %p645 = scmp.lt.s32.totalorder %s20, 1
          %s646 = scalar_select %p645, %s20, 1
          %s647 = smul.addr %s646, 4
          %s648 = smul.addr %s647, 8
          %s649 = scalar_lea.vmem %s5, %s648
        $region56: #{tpu_custom_call.1} parent=51 // pred_fallthru
          _
      $region52: #{tpu_custom_call.1} parent=5 // pred_fallthru
        _
    $region6: #{tpu_custom_call.1} parent=1 // loop_footer
      %s18 = sadd.s32 1, %s14
    $region7: #{tpu_custom_call.1} parent=1 // loop_footer_branch
      %13 = sbr.rel target = $region3
    $region8: #{tpu_custom_call.1} parent=1 // loop_exit
      _
    %650 = vsyncpa [#allocation3], 1
    %s651 = scalar_lea.sflag [#allocation3], 1
    %652 = vsyncpa %s651, 1

</llo_original>
